<compile_context>
chip_gen: v6e
topology: v6e:2x2x1
jax: 0.10.0
libtpu: 0.0.40
codegen_flags: <defaults>
</compile_context>

<pallas_src>
import jax
import jax.numpy as jnp
from jax.experimental import pallas as pl
from jax.experimental.pallas import tpu as pltpu


def lstm_cell_kernel(x_ref, h_ref, c_ref, wx_ref, wh_ref, b_ref,
                     h_out_ref, c_out_ref):
    H = c_ref.shape[1]

    x = x_ref[...]           # [Bt, D_in]  (native dtype -> MXU)
    h = h_ref[...]           # [Bt, H]
    c_old = c_ref[...].astype(jnp.float32)

    # Single fused gate pre-activation: [Bt, 4H], f32 accumulation on the MXU.
    pre = (jnp.dot(x, wx_ref[...], preferred_element_type=jnp.float32)
           + jnp.dot(h, wh_ref[...], preferred_element_type=jnp.float32)
           + b_ref[...].astype(jnp.float32))

    # Gate order in the fused weight: (i, f, o, c_tilde).
    i_g = jax.nn.sigmoid(pre[:, 0 * H:1 * H])
    f_g = jax.nn.sigmoid(pre[:, 1 * H:2 * H])
    o_g = jax.nn.sigmoid(pre[:, 2 * H:3 * H])
    c_t = jnp.tanh(pre[:, 3 * H:4 * H])

    c_new = f_g * c_old + i_g * c_t
    h_new = o_g * jnp.tanh(c_new)

    h_out_ref[...] = h_new.astype(h_out_ref.dtype)
    c_out_ref[...] = c_new.astype(c_out_ref.dtype)


def lstm_cell_forward(x, hidden_state, params, *, batch_tile=None):
    """x: [B, D_in], hidden_state: [B, 2H] (=[h | c]) -> new hidden_state [B, 2H]."""
    B, D_in = x.shape
    H = hidden_state.shape[1] // 2

    # Split hidden state outside the kernel (cheap XLA slice; keeps the kernel
    # inputs lane-dense and avoids masked partial loads at lane offset H).
    h_old = hidden_state[:, :H]
    c_old = hidden_state[:, H:]

    # Fuse the 4 gates along the output (lane) axis: [D_in + H, 4H], [1, 4H].
    w_fused = jnp.concatenate(
        [params["weight_i"], params["weight_f"], params["weight_o"], params["weight"]],
        axis=1)
    b_fused = jnp.concatenate(
        [params["bias_i"], params["bias_f"], params["bias_o"], params["bias"]],
        axis=1)
    # Split into x-part and h-part so the kernel never concatenates [x, h].
    wx = w_fused[:D_in]      # [D_in, 4H]
    wh = w_fused[D_in:]      # [H,    4H]

    # Optional batch tiling (pipelined, weights resident across tiles).
    if batch_tile is not None and B % batch_tile == 0 and batch_tile < B:
        bt = batch_tile
    else:
        bt = B
    nb = B // bt

    itemsize = jnp.dtype(x.dtype).itemsize
    bytes_accessed = (x.size + h_old.size + c_old.size) * itemsize \
        + (wx.size + wh.size + b_fused.size) * jnp.dtype(wx.dtype).itemsize \
        + 2 * B * H * itemsize
    cost = pl.CostEstimate(flops=2 * B * (D_in + H) * 4 * H,
                           transcendentals=5 * B * H,
                           bytes_accessed=int(bytes_accessed))

    h_new, c_new = pl.pallas_call(
        lstm_cell_kernel,
        out_shape=(jax.ShapeDtypeStruct((B, H), x.dtype),
                   jax.ShapeDtypeStruct((B, H), x.dtype)),
        grid=(nb,),
        in_specs=[
            pl.BlockSpec((bt, D_in), lambda b: (b, 0)),      # x       (batch-tiled)
            pl.BlockSpec((bt, H), lambda b: (b, 0)),         # h_old   (batch-tiled)
            pl.BlockSpec((bt, H), lambda b: (b, 0)),         # c_old   (batch-tiled)
            pl.BlockSpec((D_in, 4 * H), lambda b: (0, 0)),   # W_x  (resident)
            pl.BlockSpec((H, 4 * H), lambda b: (0, 0)),      # W_h  (resident)
            pl.BlockSpec((1, 4 * H), lambda b: (0, 0)),      # bias (resident)
        ],
        out_specs=(
            pl.BlockSpec((bt, H), lambda b: (b, 0)),         # h_new (lane-dense)
            pl.BlockSpec((bt, H), lambda b: (b, 0)),         # c_new (lane-dense)
        ),
        compiler_params=pltpu.CompilerParams(
            dimension_semantics=("parallel",)),              # v7x: shard batch tiles over 2 TCs
        cost_estimate=cost,
    )(x, h_old, c_old, wx, wh, b_fused)

    # Module API: [h_new | c_new] packed along the feature axis.
    return jnp.concatenate([h_new, c_new], axis=1)

# TODO(synk): for a full per-timestep LSTM rollout, lift the time loop into the
# grid so the fused weights stay VMEM-resident across steps instead of being
# re-fetched per pallas_call.


def make_params(key, input_size, hidden_size, dtype=jnp.float32):
    ks = jax.random.split(key, 8)
    shp_w = (input_size + hidden_size, hidden_size)
    shp_b = (1, hidden_size)
    scale = 1.0 / jnp.sqrt(jnp.float32(hidden_size))
    return {
        "weight_f": (jax.random.normal(ks[0], shp_w) * scale).astype(dtype),
        "bias_f":   (jax.random.normal(ks[1], shp_b) * scale).astype(dtype),
        "weight_i": (jax.random.normal(ks[2], shp_w) * scale).astype(dtype),
        "bias_i":   (jax.random.normal(ks[3], shp_b) * scale).astype(dtype),
        "weight_o": (jax.random.normal(ks[4], shp_w) * scale).astype(dtype),
        "bias_o":   (jax.random.normal(ks[5], shp_b) * scale).astype(dtype),
        "weight":   (jax.random.normal(ks[6], shp_w) * scale).astype(dtype),
        "bias":     (jax.random.normal(ks[7], shp_b) * scale).astype(dtype),
    }


def lstm_cell_reference(x, hidden_state, params):
    H = hidden_state.shape[1] // 2
    h_old, c_old = hidden_state[:, :H], hidden_state[:, H:]
    xh = jnp.concatenate([x, h_old], axis=1)
    i_g = jax.nn.sigmoid(xh @ params["weight_i"] + params["bias_i"])
    f_g = jax.nn.sigmoid(xh @ params["weight_f"] + params["bias_f"])
    o_g = jax.nn.sigmoid(xh @ params["weight_o"] + params["bias_o"])
    c_t = jnp.tanh(xh @ params["weight"] + params["bias"])
    c_new = f_g * c_old + i_g * c_t
    h_new = o_g * jnp.tanh(c_new)
    return jnp.concatenate([h_new, c_new], axis=1)


if __name__ == "__main__":
    key = jax.random.PRNGKey(0)
    k_x, k_h, k_p = jax.random.split(key, 3)

    batch = 2
    input_size = 64
    hidden_size = 32

    x = jax.random.normal(k_x, (batch, input_size), dtype=jnp.float32)
    hidden_state = jax.random.normal(k_h, (batch, 2 * hidden_size), dtype=jnp.float32)
    params = make_params(k_p, input_size, hidden_size)

    out = lstm_cell_forward(x, hidden_state, params)
    out = jax.block_until_ready(out)

    ref = lstm_cell_reference(x, hidden_state, params)
    assert out.shape == (batch, 2 * hidden_size)
    assert jnp.allclose(out, ref, atol=1e-5, rtol=1e-5), "mismatch vs JAX reference"

    print("KERNEL_OK")
</pallas_src>

<mosaic_0001>
module attributes {stable_mosaic.version = 11 : i64} {
  func.func @lstm_cell_kernel(%arg0: i32, %arg1: memref<2x64xf32, #tpu.memory_space<vmem>>, %arg2: memref<2x32xf32, #tpu.memory_space<vmem>>, %arg3: memref<2x32xf32, #tpu.memory_space<vmem>>, %arg4: memref<64x128xf32, #tpu.memory_space<vmem>>, %arg5: memref<32x128xf32, #tpu.memory_space<vmem>>, %arg6: memref<1x128xf32, #tpu.memory_space<vmem>>, %arg7: memref<2x32xf32, #tpu.memory_space<vmem>>, %arg8: memref<2x32xf32, #tpu.memory_space<vmem>>) attributes {dimension_semantics = [#tpu.dimension_semantics<parallel>], iteration_bounds = array<i64: 1>, scalar_prefetch = 0 : i64, scratch_operands = 0 : i64, tpu.core_type = #tpu.core_type<tc>, window_params = [{transform_indices = @transform_0, window_bounds = array<i64: 2, 64>}, {transform_indices = @transform_1, window_bounds = array<i64: 2, 32>}, {transform_indices = @transform_2, window_bounds = array<i64: 2, 32>}, {pipeline_mode = #tpu.pipeline_mode<synchronous>, transform_indices = @transform_3, window_bounds = array<i64: 64, 128>}, {pipeline_mode = #tpu.pipeline_mode<synchronous>, transform_indices = @transform_4, window_bounds = array<i64: 32, 128>}, {pipeline_mode = #tpu.pipeline_mode<synchronous>, transform_indices = @transform_5, window_bounds = array<i64: 1, 128>}, {transform_indices = @transform_6, window_bounds = array<i64: 2, 32>}, {transform_indices = @transform_7, window_bounds = array<i64: 2, 32>}]} {
    %c0 = arith.constant 0 : index
    %c0_0 = arith.constant 0 : index
    %0 = vector.load %arg1[%c0, %c0_0] : memref<2x64xf32, #tpu.memory_space<vmem>>, vector<2x64xf32>
    %c0_1 = arith.constant 0 : index
    %c0_2 = arith.constant 0 : index
    %1 = vector.load %arg2[%c0_1, %c0_2] : memref<2x32xf32, #tpu.memory_space<vmem>>, vector<2x32xf32>
    %c0_3 = arith.constant 0 : index
    %c0_4 = arith.constant 0 : index
    %2 = vector.load %arg3[%c0_3, %c0_4] : memref<2x32xf32, #tpu.memory_space<vmem>>, vector<2x32xf32>
    %c0_5 = arith.constant 0 : index
    %c0_6 = arith.constant 0 : index
    %3 = vector.load %arg4[%c0_5, %c0_6] : memref<64x128xf32, #tpu.memory_space<vmem>>, vector<64x128xf32>
    %cst = arith.constant dense<0.000000e+00> : vector<2x128xf32>
    %4 = tpu.matmul %0, %3, %cst {dimension_numbers = #tpu.dot_dimension_numbers<[1], [0], [0], [1], [0, 0, 1, 1], [], []>} : vector<2x64xf32>, vector<64x128xf32>, vector<2x128xf32> -> vector<2x128xf32>
    %c0_7 = arith.constant 0 : index
    %c0_8 = arith.constant 0 : index
    %5 = vector.load %arg5[%c0_7, %c0_8] : memref<32x128xf32, #tpu.memory_space<vmem>>, vector<32x128xf32>
    %cst_9 = arith.constant dense<0.000000e+00> : vector<2x128xf32>
    %6 = tpu.matmul %1, %5, %cst_9 {dimension_numbers = #tpu.dot_dimension_numbers<[1], [0], [0], [1], [0, 0, 1, 1], [], []>} : vector<2x32xf32>, vector<32x128xf32>, vector<2x128xf32> -> vector<2x128xf32>
    %7 = arith.addf %4, %6 : vector<2x128xf32>
    %c0_10 = arith.constant 0 : index
    %c0_11 = arith.constant 0 : index
    %8 = vector.load %arg6[%c0_10, %c0_11] : memref<1x128xf32, #tpu.memory_space<vmem>>, vector<1x128xf32>
    %9 = vector.broadcast %8 : vector<1x128xf32> to vector<2x128xf32>
    %10 = arith.addf %7, %9 : vector<2x128xf32>
    %11 = vector.extract_strided_slice %10 {offsets = [0, 0], sizes = [2, 32], strides = [1, 1]} : vector<2x128xf32> to vector<2x32xf32>
    %12 = arith.negf %11 : vector<2x32xf32>
    %13 = math.exp %12 : vector<2x32xf32>
    %cst_12 = arith.constant 1.000000e+00 : f32
    %14 = vector.broadcast %cst_12 : f32 to vector<2x32xf32>
    %15 = arith.addf %14, %13 : vector<2x32xf32>
    %16 = arith.divf %14, %15 : vector<2x32xf32>
    %17 = vector.extract_strided_slice %10 {offsets = [0, 32], sizes = [2, 32], strides = [1, 1]} : vector<2x128xf32> to vector<2x32xf32>
    %18 = arith.negf %17 : vector<2x32xf32>
    %19 = math.exp %18 : vector<2x32xf32>
    %cst_13 = arith.constant 1.000000e+00 : f32
    %20 = vector.broadcast %cst_13 : f32 to vector<2x32xf32>
    %21 = arith.addf %20, %19 : vector<2x32xf32>
    %22 = arith.divf %20, %21 : vector<2x32xf32>
    %23 = vector.extract_strided_slice %10 {offsets = [0, 64], sizes = [2, 32], strides = [1, 1]} : vector<2x128xf32> to vector<2x32xf32>
    %24 = arith.negf %23 : vector<2x32xf32>
    %25 = math.exp %24 : vector<2x32xf32>
    %cst_14 = arith.constant 1.000000e+00 : f32
    %26 = vector.broadcast %cst_14 : f32 to vector<2x32xf32>
    %27 = arith.addf %26, %25 : vector<2x32xf32>
    %28 = arith.divf %26, %27 : vector<2x32xf32>
    %29 = vector.extract_strided_slice %10 {offsets = [0, 96], sizes = [2, 32], strides = [1, 1]} : vector<2x128xf32> to vector<2x32xf32>
    %30 = math.tanh %29 : vector<2x32xf32>
    %31 = arith.mulf %22, %2 : vector<2x32xf32>
    %32 = arith.mulf %16, %30 : vector<2x32xf32>
    %33 = arith.addf %31, %32 : vector<2x32xf32>
    %34 = math.tanh %33 : vector<2x32xf32>
    %35 = arith.mulf %28, %34 : vector<2x32xf32>
    %c0_15 = arith.constant 0 : index
    %c0_16 = arith.constant 0 : index
    %36 = vector.load %arg7[%c0_15, %c0_16] : memref<2x32xf32, #tpu.memory_space<vmem>>, vector<2x32xf32>
    tpu.vector_store %arg7[%c0_15, %c0_16], %35 {strides = array<i32>} : memref<2x32xf32, #tpu.memory_space<vmem>>, vector<2x32xf32>,
    %c0_17 = arith.constant 0 : index
    %c0_18 = arith.constant 0 : index
    %37 = vector.load %arg8[%c0_17, %c0_18] : memref<2x32xf32, #tpu.memory_space<vmem>>, vector<2x32xf32>
    tpu.vector_store %arg8[%c0_17, %c0_18], %33 {strides = array<i32>} : memref<2x32xf32, #tpu.memory_space<vmem>>, vector<2x32xf32>,
    return
  }
  func.func @transform_0(%arg0: i32) -> (i32, i32) {
    %c0_i32 = arith.constant 0 : i32
    %c0_i32_0 = arith.constant 0 : i32
    return %arg0, %c0_i32 : i32, i32
  }
  func.func @transform_1(%arg0: i32) -> (i32, i32) {
    %c0_i32 = arith.constant 0 : i32
    %c0_i32_0 = arith.constant 0 : i32
    return %arg0, %c0_i32 : i32, i32
  }
  func.func @transform_2(%arg0: i32) -> (i32, i32) {
    %c0_i32 = arith.constant 0 : i32
    %c0_i32_0 = arith.constant 0 : i32
    return %arg0, %c0_i32 : i32, i32
  }
  func.func @transform_3(%arg0: i32) -> (i32, i32) {
    %c0_i32 = arith.constant 0 : i32
    %c0_i32_0 = arith.constant 0 : i32
    %c0_i32_1 = arith.constant 0 : i32
    return %c0_i32, %c0_i32_0 : i32, i32
  }
  func.func @transform_4(%arg0: i32) -> (i32, i32) {
    %c0_i32 = arith.constant 0 : i32
    %c0_i32_0 = arith.constant 0 : i32
    %c0_i32_1 = arith.constant 0 : i32
    return %c0_i32, %c0_i32_0 : i32, i32
  }
  func.func @transform_5(%arg0: i32) -> (i32, i32) {
    %c0_i32 = arith.constant 0 : i32
    %c0_i32_0 = arith.constant 0 : i32
    %c0_i32_1 = arith.constant 0 : i32
    return %c0_i32, %c0_i32_0 : i32, i32
  }
  func.func @transform_6(%arg0: i32) -> (i32, i32) {
    %c0_i32 = arith.constant 0 : i32
    %c0_i32_0 = arith.constant 0 : i32
    return %arg0, %c0_i32 : i32, i32
  }
  func.func @transform_7(%arg0: i32) -> (i32, i32) {
    %c0_i32 = arith.constant 0 : i32
    %c0_i32_0 = arith.constant 0 : i32
    return %arg0, %c0_i32 : i32, i32
  }
}

</mosaic_0001>

<llo_original>
// kernel: tpu_custom_call.1
$region0: #{tpu_custom_call.1}
  #allocation0 [shape = 'u32[]', space=smem, size = 0x4, offset = 0x4, fixed_abs, tag = 'smem constant byte address 0x4 - core index']
  #allocation1 [shape = 'u32[144,128]{1,0:T(1,128)}', space=vmem, size = 0x12000, scoped, tag = 'internal scratch']
  %s0 = inlined_call_operand.hbm [shape: f32[2,64], index: 0, kind: input, shape index: {}]
  %s1 = inlined_call_operand.hbm [shape: f32[2,32], index: 1, kind: input, shape index: {}]
  %s2 = inlined_call_operand.vmem [shape: f32[2,32], index: 2, kind: input, shape index: {}]
  %s3 = inlined_call_operand.hbm [shape: f32[64,128], index: 3, kind: input, shape index: {}]
  %s4 = inlined_call_operand.hbm [shape: f32[32,128], index: 4, kind: input, shape index: {}]
  %s5 = inlined_call_operand.vmem [shape: f32[1,128], index: 5, kind: input, shape index: {}]
  %s6 = inlined_call_operand.hbm [shape: f32[2,32], index: 6, kind: output, shape index: {0}]
  %s7 = inlined_call_operand.hbm [shape: f32[2,32], index: 7, kind: output, shape index: {1}]
  %8 = xla_tuple %s6, %s7
  %s9 = sld [smem:[#allocation0]]
  $region58: #{tpu_custom_call.1} parent=0
    _
  %s11 = ssub.s32 1, %s9
  %s12 = scalar_select 0, %s11, %s9
  $region1: #{tpu_custom_call.1} parent=0
    #allocation2 [shape = 'u8[1024]{0}', space=vmem, size = 0x400, scoped, tag = 'input window, operand 0, single buffered']
    #allocation3 [shape = 's32[1]{0}', space=sflag, size = 0x4, scoped, tag = 'scoped memory for tpu_custom_call.1']
    #allocation4 [shape = 's32[1]{0}', space=sflag, size = 0x4, scoped, tag = 'scoped memory for tpu_custom_call.1']
    #allocation5 [shape = 'u8[1024]{0}', space=vmem, size = 0x400, scoped, tag = 'input window, operand 1, single buffered']
    #allocation6 [shape = 's32[1]{0}', space=sflag, size = 0x4, scoped, tag = 'scoped memory for tpu_custom_call.1']
    #allocation7 [shape = 'u8[32768]{0}', space=vmem, size = 0x8000, scoped, tag = 'input window, operand 3, single buffered']
    #allocation8 [shape = 'u8[16384]{0}', space=vmem, size = 0x4000, scoped, tag = 'input window, operand 4, single buffered']
    #allocation9 [shape = 's32[1]{0}', space=sflag, size = 0x4, scoped, tag = 'scoped memory for tpu_custom_call.1']
    #allocation10 [shape = 'u8[1024]{0}', space=vmem, size = 0x400, scoped, tag = 'output window, operand 0, single buffered']
    #allocation11 [shape = 'u8[1024]{0}', space=vmem, size = 0x400, scoped, tag = 'output window, operand 1, single buffered']
    #allocation12 [shape = 's32[1]{0}', space=sflag, size = 0x4, scoped, tag = 'scoped memory for tpu_custom_call.1']
    %13 = vsyncpa [#allocation3], 0
    %14 = vsyncpa [#allocation6], 0
    %15 = vsyncpa [#allocation9], 0
    %16 = vsyncpa [#allocation4], 0
    %17 = vsyncpa [#allocation12], 0
    // Predicated region
    $region2: #{tpu_custom_call.1} parent=1 // pred_check
      _
    $region3: #{tpu_custom_call.1} parent=1 // pred_check_branch
      %19 = sbr.rel (0) target = $region5
    $region4: #{tpu_custom_call.1} parent=1 // pred_region
      %s21 = ssub.s32 32, 32
      %22 = vsyncadd [#allocation3], %s21
      %s24 = sshll.u32 [#allocation2], 4
      %s25 = int_to_ptr.vmem [resolvable:$true] %s24
      %27 = dma.hbm_to_vmem [thread:$0]  %s0, 32, %s25, [#allocation3]
    $region5: #{tpu_custom_call.1} parent=1 // pred_fallthru
      _
    // Predicated region
    $region6: #{tpu_custom_call.1} parent=1 // pred_check
      _
    $region7: #{tpu_custom_call.1} parent=1 // pred_check_branch
      %29 = sbr.rel (0) target = $region9
    $region8: #{tpu_custom_call.1} parent=1 // pred_region
      %s31 = ssub.s32 32, 32
      %32 = vsyncadd [#allocation6], %s31
      %s34 = sshll.u32 [#allocation5], 4
      %s35 = int_to_ptr.vmem [resolvable:$true] %s34
      %37 = dma.hbm_to_vmem [thread:$0]  %s1, 32, %s35, [#allocation6]
    $region9: #{tpu_custom_call.1} parent=1 // pred_fallthru
      _
    // Predicated region
    $region10: #{tpu_custom_call.1} parent=1 // pred_check
      _
    $region11: #{tpu_custom_call.1} parent=1 // pred_check_branch
      %39 = sbr.rel (0) target = $region13
    $region12: #{tpu_custom_call.1} parent=1 // pred_region
      _
    $region13: #{tpu_custom_call.1} parent=1 // pred_fallthru
      _
    // Predicated region
    $region14: #{tpu_custom_call.1} parent=1 // pred_check
      _
    $region15: #{tpu_custom_call.1} parent=1 // pred_check_branch
      %41 = sbr.rel (0) target = $region17
    $region16: #{tpu_custom_call.1} parent=1 // pred_region
      %s43 = ssub.s32 1024, 1024
      %44 = vsyncadd [#allocation6], %s43
      %s45 = sshll.u32 [#allocation7], 4
      %s46 = int_to_ptr.vmem [resolvable:$true] %s45
      %51 = dma.hbm_to_vmem [thread:$0]  %s3, 1024, %s46, [#allocation6], 128, 128, 8
    $region17: #{tpu_custom_call.1} parent=1 // pred_fallthru
      _
    // Predicated region
    $region18: #{tpu_custom_call.1} parent=1 // pred_check
      _
    $region19: #{tpu_custom_call.1} parent=1 // pred_check_branch
      %53 = sbr.rel (0) target = $region21
    $region20: #{tpu_custom_call.1} parent=1 // pred_region
      %s55 = ssub.s32 512, 512
      %56 = vsyncadd [#allocation9], %s55
      %s57 = sshll.u32 [#allocation8], 4
      %s58 = int_to_ptr.vmem [resolvable:$true] %s57
      %63 = dma.hbm_to_vmem [thread:$0]  %s4, 512, %s58, [#allocation9], 128, 128, 8
    $region21: #{tpu_custom_call.1} parent=1 // pred_fallthru
      _
    // Predicated region
    $region22: #{tpu_custom_call.1} parent=1 // pred_check
      _
    $region23: #{tpu_custom_call.1} parent=1 // pred_check_branch
      %65 = sbr.rel (0) target = $region25
    $region24: #{tpu_custom_call.1} parent=1 // pred_region
      _
    $region25: #{tpu_custom_call.1} parent=1 // pred_fallthru
      _
    // Predicated region
    $region26: #{tpu_custom_call.1} parent=1 // pred_check
      _
    $region27: #{tpu_custom_call.1} parent=1 // pred_check_branch
      %67 = sbr.rel (0) target = $region29
    $region28: #{tpu_custom_call.1} parent=1 // pred_region
      %68 = dma.done [#allocation3], 32
    $region29: #{tpu_custom_call.1} parent=1 // pred_fallthru
      _
    // Predicated region
    $region30: #{tpu_custom_call.1} parent=1 // pred_check
      _
    $region31: #{tpu_custom_call.1} parent=1 // pred_check_branch
      %70 = sbr.rel (0) target = $region33
    $region32: #{tpu_custom_call.1} parent=1 // pred_region
      %71 = dma.done [#allocation6], 32
    $region33: #{tpu_custom_call.1} parent=1 // pred_fallthru
      _
    // Predicated region
    $region34: #{tpu_custom_call.1} parent=1 // pred_check
      _
    $region35: #{tpu_custom_call.1} parent=1 // pred_check_branch
      %73 = sbr.rel (0) target = $region37
    $region36: #{tpu_custom_call.1} parent=1 // pred_region
      %74 = dma.done [#allocation6], 1024
    $region37: #{tpu_custom_call.1} parent=1 // pred_fallthru
      _
    // Predicated region
    $region38: #{tpu_custom_call.1} parent=1 // pred_check
      _
    $region39: #{tpu_custom_call.1} parent=1 // pred_check_branch
      %76 = sbr.rel (0) target = $region41
    $region40: #{tpu_custom_call.1} parent=1 // pred_region
      %77 = dma.done [#allocation9], 512
    $region41: #{tpu_custom_call.1} parent=1 // pred_fallthru
      _
    %v78 = vld [vmem:[#allocation2] sm:$0x3]
    %v79 = vld [vmem:[#allocation5] sm:$0x3]
    %v80 = vld [vmem:[%s2] sm:$0x3]
    %v81 = vld [vmem:[#allocation7] sm:$0xff]
    %v82 = vld [vmem:[#allocation7 + $0x8] sm:$0xff]
    %v83 = vld [vmem:[#allocation7 + $0x10] sm:$0xff]
    %v84 = vld [vmem:[#allocation7 + $0x18] sm:$0xff]
    %v85 = vld [vmem:[#allocation7 + $0x20] sm:$0xff]
    %v86 = vld [vmem:[#allocation7 + $0x28] sm:$0xff]
    %v87 = vld [vmem:[#allocation7 + $0x30] sm:$0xff]
    %v88 = vld [vmem:[#allocation7 + $0x38] sm:$0xff]
    %v89 = vld [vmem:[#allocation8] sm:$0xff]
    %v90 = vld [vmem:[#allocation8 + $0x8] sm:$0xff]
    %v91 = vld [vmem:[#allocation8 + $0x10] sm:$0xff]
    %v92 = vld [vmem:[#allocation8 + $0x18] sm:$0xff]
    %vm93 = vcmask 261120
    %v95 = vsel %vm93, %v79, 0
    %97 = vmatprep.subr.mxu0 0.0
    %98 = vmatpush1.msra.mxu0 0.0
    %99 = vmatprep.subr.mxu0 0.0
    %100 = vmatpush1.msra.mxu0 0.0
    %101 = vmatprep.subr.mxu0 0.0
    %102 = vmatpush1.msra.mxu0 0.0
    %103 = vmatprep.subr.mxu0 0.0
    %104 = vmatpush1.msra.mxu0 0.0
    %105 = vmatprep.subr.mxu0 0.0
    %106 = vmatpush1.msra.mxu0 0.0
    %107 = vmatprep.subr.mxu0 0.0
    %108 = vmatpush1.msra.mxu0 0.0
    %109 = vmatprep.subr.mxu0 0.0
    %110 = vmatpush1.msra.mxu0 0.0
    %111 = vmatprep.subr.mxu0 0.0
    %112 = vmatpush1.msra.mxu0 0.0
    %113 = vmatprep.subr.mxu0 0.0
    %114 = vmatpush1.msra.mxu0 0.0
    %115 = vmatprep.subr.mxu0 0.0
    %116 = vmatpush1.msra.mxu0 0.0
    %117 = vmatprep.subr.mxu0 0.0
    %118 = vmatpush1.msra.mxu0 0.0
    %119 = vmatprep.subr.mxu0 0.0
    %120 = vmatpush1.msra.mxu0 0.0
    %121 = vmatprep.subr.mxu0 0.0
    %122 = vmatpush1.msra.mxu0 %v92
    %123 = vmatprep.subr.mxu0 0.0
    %124 = vmatpush1.msra.mxu0 %v91
    %125 = vmatprep.subr.mxu0 0.0
    %126 = vmatpush1.msra.mxu0 %v90
    %127 = vmatprep.subr.mxu0 0.0
    %128 = vmatpush1.msra.mxu0 %v89
    %129 = vmatprep.subr.mxu0 0.0
    %130 = vmatpush2.msra.mxu0 0.0
    %131 = vmatprep.subr.mxu0 0.0
    %132 = vmatpush2.msra.mxu0 0.0
    %133 = vmatprep.subr.mxu0 0.0
    %134 = vmatpush2.msra.mxu0 0.0
    %135 = vmatprep.subr.mxu0 0.0
    %136 = vmatpush2.msra.mxu0 0.0
    %137 = vmatprep.subr.mxu0 0.0
    %138 = vmatpush2.msra.mxu0 0.0
    %139 = vmatprep.subr.mxu0 0.0
    %140 = vmatpush2.msra.mxu0 0.0
    %141 = vmatprep.subr.mxu0 0.0
    %142 = vmatpush2.msra.mxu0 0.0
    %143 = vmatprep.subr.mxu0 0.0
    %144 = vmatpush2.msra.mxu0 0.0
    %145 = vmatprep.subr.mxu0 0.0
    %146 = vmatpush2.msra.mxu0 0.0
    %147 = vmatprep.subr.mxu0 0.0
    %148 = vmatpush2.msra.mxu0 0.0
    %149 = vmatprep.subr.mxu0 0.0
    %150 = vmatpush2.msra.mxu0 0.0
    %151 = vmatprep.subr.mxu0 0.0
    %152 = vmatpush2.msra.mxu0 0.0
    %153 = vmatprep.subr.mxu0 0.0
    %154 = vmatpush2.msra.mxu0 0.0
    %155 = vmatprep.subr.mxu0 0.0
    %156 = vmatpush2.msra.mxu0 0.0
    %157 = vmatprep.subr.mxu0 0.0
    %158 = vmatpush2.msra.mxu0 0.0
    %159 = vmatprep.subr.mxu0 0.0
    %160 = vmatpush2.msra.mxu0 0.0
    %161 = vmatprep.mubr.f32.mxu0 0.0
    %162 = vmatmul.mubr.f32.gmra.mxu0 %v95
    %v163 = vpop.f32.mrf.mxu0
    %v164 = vadd.f32 0.0, %v163
    %v165 = vpop.f32.mrf.mxu0
    %166 = vdwg.mxu0
    %vm167 = vcmask 523264
    %v169 = vsel %vm167, %v78, 0
    %171 = vmatprep.subr.mxu0 0.0
    %172 = vmatpush1.msra.mxu0 0.0
    %173 = vmatprep.subr.mxu0 0.0
    %174 = vmatpush1.msra.mxu0 0.0
    %175 = vmatprep.subr.mxu0 0.0
    %176 = vmatpush1.msra.mxu0 0.0
    %177 = vmatprep.subr.mxu0 0.0
    %178 = vmatpush1.msra.mxu0 0.0
    %179 = vmatprep.subr.mxu0 0.0
    %180 = vmatpush1.msra.mxu0 0.0
    %181 = vmatprep.subr.mxu0 0.0
    %182 = vmatpush1.msra.mxu0 0.0
    %183 = vmatprep.subr.mxu0 0.0
    %184 = vmatpush1.msra.mxu0 0.0
    %185 = vmatprep.subr.mxu0 0.0
    %186 = vmatpush1.msra.mxu0 0.0
    %187 = vmatprep.subr.mxu0 0.0
    %188 = vmatpush1.msra.mxu0 %v88
    %189 = vmatprep.subr.mxu0 0.0
    %190 = vmatpush1.msra.mxu0 %v87
    %191 = vmatprep.subr.mxu0 0.0
    %192 = vmatpush1.msra.mxu0 %v86
    %193 = vmatprep.subr.mxu0 0.0
    %194 = vmatpush1.msra.mxu0 %v85
    %195 = vmatprep.subr.mxu0 0.0
    %196 = vmatpush1.msra.mxu0 %v84
    %197 = vmatprep.subr.mxu0 0.0
    %198 = vmatpush1.msra.mxu0 %v83
    %199 = vmatprep.subr.mxu0 0.0
    %200 = vmatpush1.msra.mxu0 %v82
    %201 = vmatprep.subr.mxu0 0.0
    %202 = vmatpush1.msra.mxu0 %v81
    %203 = vmatprep.subr.mxu0 0.0
    %204 = vmatpush2.msra.mxu0 0.0
    %205 = vmatprep.subr.mxu0 0.0
    %206 = vmatpush2.msra.mxu0 0.0
    %207 = vmatprep.subr.mxu0 0.0
    %208 = vmatpush2.msra.mxu0 0.0
    %209 = vmatprep.subr.mxu0 0.0
    %210 = vmatpush2.msra.mxu0 0.0
    %211 = vmatprep.subr.mxu0 0.0
    %212 = vmatpush2.msra.mxu0 0.0
    %213 = vmatprep.subr.mxu0 0.0
    %214 = vmatpush2.msra.mxu0 0.0
    %215 = vmatprep.subr.mxu0 0.0
    %216 = vmatpush2.msra.mxu0 0.0
    %217 = vmatprep.subr.mxu0 0.0
    %218 = vmatpush2.msra.mxu0 0.0
    %219 = vmatprep.subr.mxu0 0.0
    %220 = vmatpush2.msra.mxu0 0.0
    %221 = vmatprep.subr.mxu0 0.0
    %222 = vmatpush2.msra.mxu0 0.0
    %223 = vmatprep.subr.mxu0 0.0
    %224 = vmatpush2.msra.mxu0 0.0
    %225 = vmatprep.subr.mxu0 0.0
    %226 = vmatpush2.msra.mxu0 0.0
    %227 = vmatprep.subr.mxu0 0.0
    %228 = vmatpush2.msra.mxu0 0.0
    %229 = vmatprep.subr.mxu0 0.0
    %230 = vmatpush2.msra.mxu0 0.0
    %231 = vmatprep.subr.mxu0 0.0
    %232 = vmatpush2.msra.mxu0 0.0
    %233 = vmatprep.subr.mxu0 0.0
    %234 = vmatpush2.msra.mxu0 0.0
    %235 = vmatprep.mubr.f32.mxu0 0.0
    %236 = vmatmul.mubr.f32.gmra.mxu0 %v169
    %v237 = vpop.f32.mrf.mxu0
    %v238 = vadd.f32 %v164, %v237
    %v239 = vpop.f32.mrf.mxu0
    %240 = vdwg.mxu0
    %v241 = vld [vmem:[%s5] sm:$0x1]
    %v243 = vlaneseq
    %v244 = vshrl.u32 %v243, 7
    %v245 = vsub.s32 0, %v244
    %v246 = vrot.slane %v241, %v245
    %v248 = vadd.f32 %v238, %v246
    %v249 = vxor.u32 %v248, 2147483648
    %v250 = vmul.f32 %v249, 1.442695
    %v251 = vpow.pop %v250
    %v252 = vadd.f32 %v251, 1.0
    %v253 = vrcp.pop %v252
    %v254 = vmul.f32 1.0, %v253
    %v255 = vtanh.pop %v248
    %257 = vrot.lane.b32.xlu0 %v80, 32
    %v258 = vpop.permute.xlu0 %257
    %v260 = vmul.f32 %v254, %v258
    %262 = vrot.lane.b32.xlu0 %v255, 32
    %v263 = vpop.permute.xlu0 %262
    %v265 = vmul.f32 %v254, %v263
    %267 = vrot.lane.b32.xlu0 %v265, 32
    %v268 = vpop.permute.xlu0 %267
    %v270 = vadd.f32 %v260, %v268
    %v271 = vtanh.pop %v270
    %273 = vrot.lane.b32.xlu0 %v271, 32
    %v274 = vpop.permute.xlu0 %273
    %v276 = vmul.f32 %v254, %v274
    %278 = vrot.lane.b32.xlu0 %v276, 64
    %v279 = vpop.permute.xlu0 %278
    %vm281 = vcmask 254976
    %282 = vst.msk [vmem:[#allocation10] sm:$0x3] %vm281, %v279
    %284 = vrot.lane.b32.xlu0 %v270, 96
    %v285 = vpop.permute.xlu0 %284
    %287 = vst.msk [vmem:[#allocation11] sm:$0x3] %vm281, %v285
    // Predicated region
    $region42: #{tpu_custom_call.1} parent=1 // pred_check
      _
    $region43: #{tpu_custom_call.1} parent=1 // pred_check_branch
      %289 = sbr.rel (0) target = $region45
    $region44: #{tpu_custom_call.1} parent=1 // pred_region
      %s291 = ssub.s32 32, 32
      %292 = vsyncadd [#allocation4], %s291
      %s294 = sshll.u32 [#allocation10], 4
      %s295 = int_to_ptr.vmem [resolvable:$true] %s294
      %297 = dma.vmem_to_hbm [thread:$0]  %s295, 32, %s6, [#allocation4]
    $region45: #{tpu_custom_call.1} parent=1 // pred_fallthru
      _
    // Predicated region
    $region46: #{tpu_custom_call.1} parent=1 // pred_check
      _
    $region47: #{tpu_custom_call.1} parent=1 // pred_check_branch
      %299 = sbr.rel (0) target = $region49
    $region48: #{tpu_custom_call.1} parent=1 // pred_region
      %s301 = ssub.s32 32, 32
      %302 = vsyncadd [#allocation12], %s301
      %s304 = sshll.u32 [#allocation11], 4
      %s305 = int_to_ptr.vmem [resolvable:$true] %s304
      %307 = dma.vmem_to_hbm [thread:$0]  %s305, 32, %s7, [#allocation12]
    $region49: #{tpu_custom_call.1} parent=1 // pred_fallthru
      _
    // Predicated region
    $region50: #{tpu_custom_call.1} parent=1 // pred_check
      _
    $region51: #{tpu_custom_call.1} parent=1 // pred_check_branch
      %309 = sbr.rel (0) target = $region53
    $region52: #{tpu_custom_call.1} parent=1 // pred_region
      %310 = dma.done [#allocation4], 32
    $region53: #{tpu_custom_call.1} parent=1 // pred_fallthru
      _
    // Predicated region
    $region54: #{tpu_custom_call.1} parent=1 // pred_check
      _
    $region55: #{tpu_custom_call.1} parent=1 // pred_check_branch
      %312 = sbr.rel (0) target = $region57
    $region56: #{tpu_custom_call.1} parent=1 // pred_region
      %313 = dma.done [#allocation12], 32
    $region57: #{tpu_custom_call.1} parent=1 // pred_fallthru
      _
    %314 = vsyncpa [#allocation3], 1
    %315 = vsyncpa [#allocation6], 1
    %316 = vsyncpa [#allocation9], 1
    %317 = vsyncpa [#allocation4], 1
    %318 = vsyncpa [#allocation12], 1

</llo_original>
